<compile_context>
chip_gen: v5e
topology: v5e:2x2
jax: 0.10.0
libtpu: 0.0.40
codegen_flags: <defaults>
</compile_context>

<pallas_src>
import functools

import jax
import jax.numpy as jnp
from jax import lax
from jax.experimental import pallas as pl
from jax.experimental.pallas import tpu as pltpu

EPS = 1e-08
SMOOTH = 0.01                       # default `smooth` of iou_loss

_LANES = 128
_VMEM_BUDGET = 20 * 1024 * 1024     # target per-step working set
_VMEM_LIMIT = 32 * 1024 * 1024      # requested scoped VMEM (fits v5e/v6e/v7x)


def _soft_dice_tp_kernel(logit_ref, gt_ref, tp_ref, *,
                         n_rows, tiles_per_split, block_rows):
    """Accumulate per-lane partial sums of softmax(logit)[true_class]."""
    # logit_ref: (1, C, TS, 128)  input dtype (f32 or bf16)
    # gt_ref   : (1, TS, 128)     integer labels (int8 preferred); -1 == pad
    # tp_ref   : (1, 1, 1, 128)   f32 output block, resident across the t axis
    p = pl.program_id(1)
    t = pl.program_id(2)

    @pl.when(t == 0)
    def _init():
        tp_ref[...] = jnp.zeros_like(tp_ref)

    # f32 math even for bf16 inputs (bf16 only halves HBM traffic).
    logits = logit_ref[0].astype(jnp.float32)        # (C, TS, 128)
    labels = gt_ref[0].astype(jnp.int32)             # (TS, 128)

    # Channel axis is the leading axis -> these reductions are vreg-wise VPU
    # ops over C planes (no sublane/lane XLU work, no vreg padding waste).
    m = jnp.max(logits, axis=0)                      # (TS, 128)
    e = jnp.exp(logits - m[None])                    # (C, TS, 128)  EUP
    denom = jnp.sum(e, axis=0)                       # (TS, 128)
    cls = lax.broadcasted_iota(jnp.int32, logits.shape, 0)
    sel = jnp.sum(jnp.where(cls == labels[None], e, 0.0), axis=0)   # (TS, 128)

    # One reciprocal per pixel (exp dominates the EUP slot).  approx=True is
    # marginally cheaper (~1e-3 rel err); kept exact to match the reference.
    contrib = sel * pl.reciprocal(denom, approx=False)

    # Mask rows past the padded spatial extent: covers the ragged last row
    # tile and fully out-of-range tiles of an uneven core split (their block
    # index was clamped in the index_map, so whatever got DMA'd is zeroed
    # here and never double counted; padded lanes inside valid rows already
    # contribute 0 via label == -1).
    row0 = (p * tiles_per_split + t) * block_rows
    rows = row0 + lax.broadcasted_iota(jnp.int32, (block_rows, _LANES), 0)
    contrib = jnp.where(rows < n_rows, contrib, 0.0)

    # Lane-shaped partial accumulation; the single cross-lane reduce happens
    # once in the wrapper, not on every grid step's tail.
    tp_ref[...] = tp_ref[...] + jnp.sum(contrib, axis=0, keepdims=True)[None, None]


def soft_dice_loss_pallas(logit, gt, *, reduction="mean", max_rows_per_tile=None):
    """SoftDiceLoss forward.

    logit: (B, C, H, W) float32 or bfloat16 (bf16 halves HBM read traffic).
    gt   : (B, H, W) or (B, 1, H, W) integer labels; int8 labels (C <= 127)
           additionally shrink label traffic 4x.
    max_rows_per_tile: optional cap on the 128-pixel row tile (test/tuning).
    """
    B, C, H, W = logit.shape
    if gt.ndim == logit.ndim:                       # (B, 1, H, W)
        gt = gt.reshape(B, H, W)
    if not jnp.issubdtype(gt.dtype, jnp.signedinteger):
        gt = gt.astype(jnp.int32)

    HW = H * W
    S = pl.cdiv(HW, _LANES)                         # rows of 128 pixels
    hw_pad = S * _LANES

    # Flatten spatial dims onto (rows, 128).  Pad only up to a multiple of
    # 128 lanes, and skip the pad entirely when HW % 128 == 0 (jnp.pad would
    # otherwise materialize a full extra HBM copy of the inputs).
    logit3 = logit.reshape(B, C, HW)
    gt2 = gt.reshape(B, HW)
    if hw_pad != HW:
        logit3 = jnp.pad(logit3, ((0, 0), (0, 0), (0, hw_pad - HW)))
        # label -1 never matches a class id -> padded pixels contribute 0.
        gt2 = jnp.pad(gt2, ((0, 0), (0, hw_pad - HW)), constant_values=-1)
    logit4 = logit3.reshape(B, C, S, _LANES)
    gt3 = gt2.reshape(B, S, _LANES)

    # ---- VMEM-aware row-tile selection ---------------------------------
    in_bytes = jnp.dtype(logit.dtype).itemsize
    gt_bytes = jnp.dtype(gt3.dtype).itemsize

    def _per_row(gtb):
        # 2x double-buffered inputs + ~5 block-sized f32 temporaries.
        return 2 * (C * _LANES * in_bytes + _LANES * gtb) + 5 * (C * _LANES * 4)

    ts_quant = 32            # legal sublane quantum for f32/bf16 logits + int8/int32 gt
    ts_raw = _VMEM_BUDGET // _per_row(gt_bytes)
    if ts_raw < ts_quant:
        # Very large class counts: use 8-row quanta; int32 labels keep the gt
        # block layout-legal at that granularity.
        gt3 = gt3.astype(jnp.int32)
        gt_bytes = 4
        ts_quant = 8
        ts_raw = _VMEM_BUDGET // _per_row(gt_bytes)

    ts = max(ts_quant, (ts_raw // ts_quant) * ts_quant)
    if max_rows_per_tile is not None:
        ts = min(ts, max(ts_quant, (max_rows_per_tile // ts_quant) * ts_quant))
    if ts >= S:
        ts = S                                       # single full-dim row tile
    n_tiles = pl.cdiv(S, ts)

    # Split the HW reduction across 2 shards when the batch alone cannot fill
    # both TensorCores of a v7x megacore (harmless single shard otherwise).
    nsplit = 2 if (B == 1 and n_tiles >= 2) else 1
    tiles_per_split = pl.cdiv(n_tiles, nsplit)

    def _row_block(p, t):
        # Clamp so an uneven split never yields an out-of-range block index;
        # the kernel masks any duplicated/garbage rows by global row id.
        return jnp.minimum(p * tiles_per_split + t, n_tiles - 1)

    kernel = functools.partial(_soft_dice_tp_kernel, n_rows=S,
                               tiles_per_split=tiles_per_split, block_rows=ts)

    tp_slab = pl.pallas_call(
        kernel,
        out_shape=jax.ShapeDtypeStruct((B, nsplit, 1, _LANES), jnp.float32),
        grid_spec=pltpu.PrefetchScalarGridSpec(
            num_scalar_prefetch=0,
            grid=(B, nsplit, tiles_per_split),
            in_specs=[
                pl.BlockSpec((1, C, ts, _LANES),
                             lambda b, p, t: (b, 0, _row_block(p, t), 0)),
                pl.BlockSpec((1, ts, _LANES),
                             lambda b, p, t: (b, _row_block(p, t), 0)),
            ],
            out_specs=pl.BlockSpec((1, 1, 1, _LANES),
                                   lambda b, p, t: (b, p, 0, 0)),
        ),
        compiler_params=pltpu.CompilerParams(
            dimension_semantics=("parallel", "parallel", "arbitrary"),
            vmem_limit_bytes=_VMEM_LIMIT),
    )(logit4, gt3)

    # Single cross-lane / cross-split reduce + closed-form dice on (B,) scalars.
    tp = tp_slab.sum(axis=(1, 2, 3))                 # (B,)
    hw_valid = float(HW)
    iou = (tp + SMOOTH) / (2.0 * hw_valid - tp + EPS + SMOOTH)
    iou_l = 1.0 - iou
    dice = 2.0 * iou_l / (1.0 + iou_l)

    if reduction == "mean":
        return dice.mean()
    elif reduction == "none":
        return dice
    else:
        raise ValueError(f"Unrecognized reduction method ({reduction}).")


def _reference_soft_dice(logit, gt):
    """Pure-JAX replica of the PyTorch forward (softmax activation)."""
    B, C = logit.shape[0], logit.shape[1]
    pred = jax.nn.softmax(logit.astype(jnp.float32), axis=1).reshape(B, -1)
    gt_oh = jax.nn.one_hot(gt, C, axis=1, dtype=jnp.float32).reshape(B, -1)
    tp = (pred * gt_oh).sum(-1)
    fp = (pred * (1.0 - gt_oh)).sum(-1)
    fn = ((1.0 - pred) * gt_oh).sum(-1)
    iou = (tp + SMOOTH) / (tp + fp + fn + EPS + SMOOTH)
    iou_l = 1.0 - iou
    return 2.0 * iou_l / (1.0 + iou_l)


if __name__ == "__main__":
    key = jax.random.PRNGKey(0)
    k1, k2, k3, k4, k5, k6 = jax.random.split(key, 6)

    # --- case 1: B=2, C=4, 16x16, f32 logits, int8 labels, single row tile ---
    B, C, H, W = 2, 4, 16, 16
    logit = jax.random.normal(k1, (B, C, H, W), dtype=jnp.float32)
    gt = jax.random.randint(k2, (B, H, W), 0, C, dtype=jnp.int32)
    gt8 = gt.astype(jnp.int8)

    loss_none = jax.block_until_ready(
        soft_dice_loss_pallas(logit, gt8, reduction="none"))
    loss_mean = jax.block_until_ready(
        soft_dice_loss_pallas(logit, gt8, reduction="mean"))
    ref_none = _reference_soft_dice(logit, gt)
    assert jnp.allclose(loss_none, ref_none, rtol=1e-4, atol=1e-6), (
        loss_none, ref_none)
    assert jnp.allclose(loss_mean, ref_none.mean(), rtol=1e-4, atol=1e-6)

    # --- case 2: B=1, C=3, 96x96 (72 rows of 128 px), forced 32-row tiles:
    #     exercises multi-tile accumulation, the ragged last tile and the
    #     2-way megacore HW split with an uneven tile count ---
    B2, C2, H2, W2 = 1, 3, 96, 96
    logit2 = jax.random.normal(k3, (B2, C2, H2, W2), dtype=jnp.float32)
    gt2 = jax.random.randint(k4, (B2, H2, W2), 0, C2, dtype=jnp.int32)
    loss2 = jax.block_until_ready(
        soft_dice_loss_pallas(logit2, gt2.astype(jnp.int8), reduction="none",
                              max_rows_per_tile=32))
    ref2 = _reference_soft_dice(logit2, gt2)
    assert jnp.allclose(loss2, ref2, rtol=1e-4, atol=1e-6), (loss2, ref2)

    # --- case 3: spatial size not a multiple of 128 (exercises lane padding),
    #     int32 labels ---
    B3, C3, H3, W3 = 2, 3, 5, 7
    logit3 = jax.random.normal(k5, (B3, C3, H3, W3), dtype=jnp.float32)
    gt3 = jax.random.randint(k6, (B3, H3, W3), 0, C3, dtype=jnp.int32)
    loss3 = jax.block_until_ready(
        soft_dice_loss_pallas(logit3, gt3, reduction="none"))
    ref3 = _reference_soft_dice(logit3, gt3)
    assert jnp.allclose(loss3, ref3, rtol=1e-4, atol=1e-6), (loss3, ref3)

    # --- case 4: bf16 logits (kernel upcasts to f32 internally, so it matches
    #     the f32 reference evaluated on the rounded logits) ---
    logit_bf16 = logit.astype(jnp.bfloat16)
    loss4 = jax.block_until_ready(
        soft_dice_loss_pallas(logit_bf16, gt8, reduction="none"))
    ref4 = _reference_soft_dice(logit_bf16.astype(jnp.float32), gt)
    assert jnp.allclose(loss4, ref4, rtol=1e-4, atol=1e-6), (loss4, ref4)

    print("KERNEL_OK")
</pallas_src>

<mosaic_0001>
module attributes {stable_mosaic.version = 11 : i64} {
  func.func @_soft_dice_tp_kernel(%arg0: i32, %arg1: i32, %arg2: i32, %arg3: memref<1x4x2x128xf32, #tpu.memory_space<vmem>>, %arg4: memref<1x2x128xi8, #tpu.memory_space<vmem>>, %arg5: memref<1x1x1x128xf32, #tpu.memory_space<vmem>>) attributes {dimension_semantics = [#tpu.dimension_semantics<parallel>, #tpu.dimension_semantics<parallel>, #tpu.dimension_semantics<arbitrary>], iteration_bounds = array<i64: 2, 1, 1>, scalar_prefetch = 0 : i64, scratch_operands = 0 : i64, tpu.core_type = #tpu.core_type<tc>, window_params = [{transform_indices = @transform_0, window_bounds = array<i64: 1, 4, 2, 128>}, {transform_indices = @transform_1, window_bounds = array<i64: 1, 2, 128>}, {transform_indices = @transform_2, window_bounds = array<i64: 1, 1, 1, 128>}]} {
    %c0_i32 = arith.constant 0 : i32
    %0 = arith.cmpi eq, %arg2, %c0_i32 : i32
    %1 = arith.extui %0 : i1 to i32
    %c0_i32_0 = arith.constant 0 : i32
    %2 = arith.cmpi ne, %1, %c0_i32_0 : i32
    scf.if %2 {
      %cst_21 = arith.constant 0.000000e+00 : f32
      %39 = vector.broadcast %cst_21 : f32 to vector<1x1x1x128xf32>
      %c0_22 = arith.constant 0 : index
      %c0_23 = arith.constant 0 : index
      %c0_24 = arith.constant 0 : index
      %c0_25 = arith.constant 0 : index
      %40 = vector.load %arg5[%c0_22, %c0_23, %c0_24, %c0_25] : memref<1x1x1x128xf32, #tpu.memory_space<vmem>>, vector<1x1x1x128xf32>
      tpu.vector_store %arg5[%c0_22, %c0_23, %c0_24, %c0_25], %39 {strides = array<i32>} : memref<1x1x1x128xf32, #tpu.memory_space<vmem>>, vector<1x1x1x128xf32>,
    } else {
    }
    %c0 = arith.constant 0 : index
    %c0_1 = arith.constant 0 : index
    %c0_2 = arith.constant 0 : index
    %c0_3 = arith.constant 0 : index
    %3 = vector.load %arg3[%c0, %c0_1, %c0_2, %c0_3] : memref<1x4x2x128xf32, #tpu.memory_space<vmem>>, vector<1x4x2x128xf32>
    %4 = vector.shape_cast %3 : vector<1x4x2x128xf32> to vector<4x2x128xf32>
    %c0_4 = arith.constant 0 : index
    %c0_5 = arith.constant 0 : index
    %c0_6 = arith.constant 0 : index
    %5 = vector.load %arg4[%c0_4, %c0_5, %c0_6] : memref<1x2x128xi8, #tpu.memory_space<vmem>>, vector<1x2x128xi8>
    %6 = vector.shape_cast %5 : vector<1x2x128xi8> to vector<2x128xi8>
    %7 = arith.extsi %6 : vector<2x128xi8> to vector<2x128xi32>
    %cst = arith.constant dense<0xFF800000> : vector<2x128xf32>
    %8 = vector.multi_reduction <maximumf>, %4, %cst [0] : vector<4x2x128xf32> to vector<2x128xf32>
    %9 = vector.shape_cast %8 : vector<2x128xf32> to vector<1x2x128xf32>
    %10 = vector.broadcast %9 : vector<1x2x128xf32> to vector<4x2x128xf32>
    %11 = arith.subf %4, %10 : vector<4x2x128xf32>
    %12 = math.exp %11 : vector<4x2x128xf32>
    %cst_7 = arith.constant dense<0.000000e+00> : vector<2x128xf32>
    %13 = vector.multi_reduction <add>, %12, %cst_7 [0] : vector<4x2x128xf32> to vector<2x128xf32>
    %14 = tpu.iota {dimensions = array<i32: 0>} : vector<4x2x128xi32>
    %15 = vector.shape_cast %7 : vector<2x128xi32> to vector<1x2x128xi32>
    %16 = vector.broadcast %15 : vector<1x2x128xi32> to vector<4x2x128xi32>
    %17 = arith.cmpi eq, %14, %16 : vector<4x2x128xi32>
    %cst_8 = arith.constant 0.000000e+00 : f32
    %18 = vector.broadcast %cst_8 : f32 to vector<4x2x128xf32>
    %19 = arith.select %17, %12, %18 : vector<4x2x128xi1>, vector<4x2x128xf32>
    %cst_9 = arith.constant dense<0.000000e+00> : vector<2x128xf32>
    %20 = vector.multi_reduction <add>, %19, %cst_9 [0] : vector<4x2x128xf32> to vector<2x128xf32>
    %21 = tpu.reciprocal %13 : vector<2x128xf32> -> vector<2x128xf32>
    %22 = arith.mulf %20, %21 : vector<2x128xf32>
    %c1_i32 = arith.constant 1 : i32
    %23 = arith.muli %arg1, %c1_i32 : i32
    %24 = arith.addi %23, %arg2 : i32
    %c2_i32 = arith.constant 2 : i32
    %25 = arith.muli %24, %c2_i32 : i32
    %26 = tpu.iota {dimensions = array<i32: 0>} : vector<2x128xi32>
    %27 = vector.broadcast %25 : i32 to vector<2x128xi32>
    %28 = arith.addi %27, %26 : vector<2x128xi32>
    %c2_i32_10 = arith.constant 2 : i32
    %29 = vector.broadcast %c2_i32_10 : i32 to vector<2x128xi32>
    %30 = arith.cmpi slt, %28, %29 : vector<2x128xi32>
    %cst_11 = arith.constant 0.000000e+00 : f32
    %31 = vector.broadcast %cst_11 : f32 to vector<2x128xf32>
    %32 = arith.select %30, %22, %31 : vector<2x128xi1>, vector<2x128xf32>
    %c0_12 = arith.constant 0 : index
    %c0_13 = arith.constant 0 : index
    %c0_14 = arith.constant 0 : index
    %c0_15 = arith.constant 0 : index
    %33 = vector.load %arg5[%c0_12, %c0_13, %c0_14, %c0_15] : memref<1x1x1x128xf32, #tpu.memory_space<vmem>>, vector<1x1x1x128xf32>
    %cst_16 = arith.constant dense<0.000000e+00> : vector<128xf32>
    %34 = vector.multi_reduction <add>, %32, %cst_16 [0] : vector<2x128xf32> to vector<128xf32>
    %35 = vector.shape_cast %34 : vector<128xf32> to vector<1x128xf32>
    %36 = vector.shape_cast %35 : vector<1x128xf32> to vector<1x1x1x128xf32>
    %37 = arith.addf %33, %36 : vector<1x1x1x128xf32>
    %c0_17 = arith.constant 0 : index
    %c0_18 = arith.constant 0 : index
    %c0_19 = arith.constant 0 : index
    %c0_20 = arith.constant 0 : index
    %38 = vector.load %arg5[%c0_17, %c0_18, %c0_19, %c0_20] : memref<1x1x1x128xf32, #tpu.memory_space<vmem>>, vector<1x1x1x128xf32>
    tpu.vector_store %arg5[%c0_17, %c0_18, %c0_19, %c0_20], %37 {strides = array<i32>} : memref<1x1x1x128xf32, #tpu.memory_space<vmem>>, vector<1x1x1x128xf32>,
    return
  }
  func.func @transform_0(%arg0: i32, %arg1: i32, %arg2: i32) -> (i32, i32, i32, i32) {
    %c1_i32 = arith.constant 1 : i32
    %0 = arith.muli %arg1, %c1_i32 : i32
    %1 = arith.addi %0, %arg2 : i32
    %c0_i32 = arith.constant 0 : i32
    %2 = arith.minsi %1, %c0_i32 : i32
    %c0_i32_0 = arith.constant 0 : i32
    %c0_i32_1 = arith.constant 0 : i32
    %c0_i32_2 = arith.constant 0 : i32
    return %arg0, %c0_i32_0, %2, %c0_i32_1 : i32, i32, i32, i32
  }
  func.func @transform_1(%arg0: i32, %arg1: i32, %arg2: i32) -> (i32, i32, i32) {
    %c1_i32 = arith.constant 1 : i32
    %0 = arith.muli %arg1, %c1_i32 : i32
    %1 = arith.addi %0, %arg2 : i32
    %c0_i32 = arith.constant 0 : i32
    %2 = arith.minsi %1, %c0_i32 : i32
    %c0_i32_0 = arith.constant 0 : i32
    %c0_i32_1 = arith.constant 0 : i32
    return %arg0, %2, %c0_i32_0 : i32, i32, i32
  }
  func.func @transform_2(%arg0: i32, %arg1: i32, %arg2: i32) -> (i32, i32, i32, i32) {
    %c0_i32 = arith.constant 0 : i32
    %c0_i32_0 = arith.constant 0 : i32
    %c0_i32_1 = arith.constant 0 : i32
    return %arg0, %arg1, %c0_i32, %c0_i32_0 : i32, i32, i32, i32
  }
}

</mosaic_0001>

<llo_original>
// kernel: tpu_custom_call.1
$region0: #{tpu_custom_call.1}
  #allocation0 [shape = 'u32[]', space=smem, size = 0x4, offset = 0x4, fixed_abs, tag = 'smem constant byte address 0x4 - core index']
  #allocation1 [shape = 'u32[72,128]{1,0:T(1,128)}', space=vmem, size = 0x9000, scoped, tag = 'internal scratch']
  %s0 = inlined_call_operand.hbm [shape: f32[2,4,2,128], index: 0, kind: input, shape index: {}]
  %s1 = inlined_call_operand.hbm [shape: s8[2,2,128], index: 1, kind: input, shape index: {}]
  %s2 = inlined_call_operand.hbm [shape: f32[2,1,1,128], index: 2, kind: output, shape index: {}]
  %s3 = sld [smem:[#allocation0]]
  $region53: #{tpu_custom_call.1} parent=0
    _
  %s5 = ssub.s32 1, %s3
  %s6 = scalar_select 0, %s5, %s3
  $region1: #{tpu_custom_call.1} parent=0
    #allocation2 [shape = 'u8[8192]{0}', space=vmem, size = 0x2000, scoped, tag = 'input window, operand 0']
    #allocation3 [shape = 's32[2]{0}', space=sflag, size = 0x8, scoped, tag = 'scoped memory for tpu_custom_call.1']
    #allocation4 [shape = 's32[2]{0}', space=sflag, size = 0x8, scoped, tag = 'scoped memory for tpu_custom_call.1']
    #allocation5 [shape = 'u8[1024]{0}', space=vmem, size = 0x400, scoped, tag = 'input window, operand 1']
    #allocation6 [shape = 's32[2]{0}', space=sflag, size = 0x8, scoped, tag = 'scoped memory for tpu_custom_call.1']
    #allocation7 [shape = 'u8[1024]{0}', space=vmem, size = 0x400, scoped, tag = 'output window, operand 0']
    %7 = vsyncpa [#allocation3], 0
    %s8 = scalar_lea.sflag [#allocation3], 1
    %9 = vsyncpa %s8, 0
    %10 = vsyncpa [#allocation6], 0
    %s11 = scalar_lea.sflag [#allocation6], 1
    %12 = vsyncpa %s11, 0
    %13 = vsyncpa [#allocation4], 0
    %s14 = scalar_lea.sflag [#allocation4], 1
    %15 = vsyncpa %s14, 0
    loop: start=0, step=1, limit=4
    $region2: #{tpu_custom_call.1} parent=1 // loop_pre_header
      _
    $region3: #{tpu_custom_call.1} parent=1 // loop_header
      %s17 = sphi 0, %s21
      %p18 = scmp.ge.s32.totalorder %s17, 4
      %s24 = sphi 0, %s43
      %s25 = sphi 0, %s39
      %s26 = sphi 0, %s35
      %s27 = sphi 0, %s24
      %s28 = sphi 0, %s25
      %s29 = sphi 0, %s26
      %s30 = sphi 0, %s27
      %s31 = sphi 0, %s28
      %s32 = sphi 0, %s29
      %s54 = sphi 0, %s56
      %s57 = sphi 0, %s54
      %s58 = sphi 0, %s57
      %s74 = sphi 0, %s58
      %s88 = sphi 0, %s90
      %s91 = sphi 0, %s88
      %s92 = sphi 0, %s91
      %s108 = sphi 0, %s92
      %s116 = sphi 0, %s118
      %s119 = sphi 0, %s116
      %s120 = sphi 0, %s119
      %s136 = sphi 0, %s120
    $region4: #{tpu_custom_call.1} parent=1 // loop_header_branch
      %20 = sbr.rel (%p18) target = $region8
    $region5: #{tpu_custom_call.1} parent=1 // loop_body
      %s22 = ssub.s32 %s17, 1
      %s23 = ssub.s32 %s17, 2
      %s33 = sadd.s32 1, %s26
      %p34 = scmp.ge.s32.totalorder %s33, 1
      %s35 = scalar_select %p34, 0, %s33
      %s36 = sadd.s32 1, %s25
      %s37 = scalar_select %p34, %s36, %s25
      %p38 = scmp.ge.s32.totalorder %s37, 1
      %s39 = scalar_select %p38, 0, %s37
      %s40 = sadd.s32 1, %s24
      %s41 = scalar_select %p38, %s40, %s24
      %p42 = scmp.ge.s32.totalorder %s41, 2
      %s43 = scalar_select %p42, 0, %s41
      %s44 = sadd.s32 %s25, %s26
      %p45 = scmp.lt.s32.totalorder %s44, 0
      %s46 = scalar_select %p45, %s44, 0
      %s47 = sadd.s32 %s39, %s35
      %p48 = scmp.lt.s32.totalorder %s47, 0
      %s49 = scalar_select %p48, %s47, 0
      %s50 = ssub.s32 %s24, %s43
      %s51 = ssub.s32 %s46, %s49
      %s52 = sor.u32 %s50, %s51
      %p53 = scmp.eq.s32.totalorder %s52, 0
      %s55 = sadd.s32 %s54, 1
      %s56 = scalar_select %p53, %s54, %s55
      %p59 = pneg %p53
      %p60 = scmp.eq.s32.totalorder %s17, 1
      %p61 = por %p59, %p60
      %p62 = scmp.ne.s32.totalorder %s54, %s57
      %p63 = scmp.eq.s32.totalorder %s17, 0
      %p64 = por %p62, %p63
      %p65 = scmp.ne.s32.totalorder %s54, %s57
      %p66 = scmp.eq.s32.totalorder %s22, 1
      %p67 = por %p65, %p66
      %p68 = scmp.ne.s32.totalorder %s57, %s58
      %p69 = scmp.eq.s32.totalorder %s22, 0
      %p70 = por %p68, %p69
      %p71 = scmp.ne.s32.totalorder %s57, %s58
      %p72 = scmp.eq.s32.totalorder %s23, 1
      %p73 = por %p71, %p72
      %p75 = scmp.ne.s32.totalorder %s58, %s74
      %p76 = scmp.eq.s32.totalorder %s23, 0
      %p77 = por %p75, %p76
      %s78 = sadd.s32 %s25, %s26
      %p79 = scmp.lt.s32.totalorder %s78, 0
      %s80 = scalar_select %p79, %s78, 0
      %s81 = sadd.s32 %s39, %s35
      %p82 = scmp.lt.s32.totalorder %s81, 0
      %s83 = scalar_select %p82, %s81, 0
      %s84 = ssub.s32 %s24, %s43
      %s85 = ssub.s32 %s80, %s83
      %s86 = sor.u32 %s84, %s85
      %p87 = scmp.eq.s32.totalorder %s86, 0
      %s89 = sadd.s32 %s88, 1
      %s90 = scalar_select %p87, %s88, %s89
      %p93 = pneg %p87
      %p94 = scmp.eq.s32.totalorder %s17, 1
      %p95 = por %p93, %p94
      %p96 = scmp.ne.s32.totalorder %s88, %s91
      %p97 = scmp.eq.s32.totalorder %s17, 0
      %p98 = por %p96, %p97
      %p99 = scmp.ne.s32.totalorder %s88, %s91
      %p100 = scmp.eq.s32.totalorder %s22, 1
      %p101 = por %p99, %p100
      %p102 = scmp.ne.s32.totalorder %s91, %s92
      %p103 = scmp.eq.s32.totalorder %s22, 0
      %p104 = por %p102, %p103
      %p105 = scmp.ne.s32.totalorder %s91, %s92
      %p106 = scmp.eq.s32.totalorder %s23, 1
      %p107 = por %p105, %p106
      %p109 = scmp.ne.s32.totalorder %s92, %s108
      %p110 = scmp.eq.s32.totalorder %s23, 0
      %p111 = por %p109, %p110
      %s112 = ssub.s32 %s24, %s43
      %s113 = ssub.s32 %s25, %s39
      %s114 = sor.u32 %s112, %s113
      %p115 = scmp.eq.s32.totalorder %s114, 0
      %s117 = sadd.s32 %s116, 1
      %s118 = scalar_select %p115, %s116, %s117
      %p121 = pneg %p115
      %p122 = scmp.eq.s32.totalorder %s17, 1
      %p123 = por %p121, %p122
      %p124 = scmp.ne.s32.totalorder %s116, %s119
      %p125 = scmp.eq.s32.totalorder %s17, 0
      %p126 = por %p124, %p125
      %p127 = scmp.ne.s32.totalorder %s116, %s119
      %p128 = scmp.eq.s32.totalorder %s22, 1
      %p129 = por %p127, %p128
      %p130 = scmp.ne.s32.totalorder %s119, %s120
      %p131 = scmp.eq.s32.totalorder %s22, 0
      %p132 = por %p130, %p131
      %p133 = scmp.ne.s32.totalorder %s119, %s120
      %p134 = scmp.eq.s32.totalorder %s23, 1
      %p135 = por %p133, %p134
      %p137 = scmp.ne.s32.totalorder %s120, %s136
      %p138 = scmp.eq.s32.totalorder %s23, 0
      %p139 = por %p137, %p138
      %p140 = scmp.le.s32.totalorder 1, %s17
      %p141 = scmp.lt.s32.totalorder %s17, 3
      %p142 = pnand %p140, %p141
      %p143 = pneg %p142
      // Predicated region
      $region9: #{tpu_custom_call.1} parent=5 // pred_check
        _
      $region10: #{tpu_custom_call.1} parent=5 // pred_check_branch
        %145 = sbr.rel (%p142) target = $region12
      $region11: #{tpu_custom_call.1} parent=5 // pred_region
        %s146 = ssub.s32 %s17, 1
      $region12: #{tpu_custom_call.1} parent=5 // pred_fallthru
        _
      %p147 = scmp.lt.s32.totalorder %s17, 2
      // Predicated region
      $region13: #{tpu_custom_call.1} parent=5 // pred_check
        %p148 = pneg %p147
      $region14: #{tpu_custom_call.1} parent=5 // pred_check_branch
        %150 = sbr.rel (%p148) target = $region16
      $region15: #{tpu_custom_call.1} parent=5 // pred_region
        // Predicated region
        $region17: #{tpu_custom_call.1} parent=15 // pred_check
          %p151 = pneg %p64
        $region18: #{tpu_custom_call.1} parent=15 // pred_check_branch
          %153 = sbr.rel (%p151) target = $region20
        $region19: #{tpu_custom_call.1} parent=15 // pred_region
          %s154 = sand.u32 %s54, 1
          %s155 = scalar_lea.sflag [#allocation3], %s154
          %s156 = sand.u32 %s54, 1
          %s157 = smul.addr %s156, 8
          %s158 = scalar_lea.vmem [#allocation2], %s157
          %s159 = sadd.s32 %s25, %s26
          %p160 = scmp.lt.s32.totalorder %s159, 0
          %s161 = scalar_select %p160, %s159, 0
          %163 = vsyncadd %s155, 0
          %s164 = smul.addr %s24, 4
          %s165 = sadd.s32 %s161, %s164
          %s166 = smul.addr %s165, 2
          %s167 = scalar_lea.hbm %s0, %s166
          %s168 = sshll.u32 %s167, 4
          %s169 = int_to_ptr.hbm [resolvable:$true] %s168
          %s170 = sshll.u32 %s158, 4
          %s171 = int_to_ptr.vmem [resolvable:$true] %s170
          %176 = dma.hbm_to_vmem [thread:$0]  %s169, 128, %s171, %s155, 32, 32, 2
        $region20: #{tpu_custom_call.1} parent=15 // pred_fallthru
          _
        // Predicated region
        $region21: #{tpu_custom_call.1} parent=15 // pred_check
          %p177 = pneg %p98
        $region22: #{tpu_custom_call.1} parent=15 // pred_check_branch
          %179 = sbr.rel (%p177) target = $region24
        $region23: #{tpu_custom_call.1} parent=15 // pred_region
          %s180 = sand.u32 %s88, 1
          %s181 = scalar_lea.sflag [#allocation6], %s180
          %s182 = sand.u32 %s88, 1
          %s183 = scalar_lea.vmem [#allocation5], %s182
          %s184 = sadd.s32 %s25, %s26
          %p185 = scmp.lt.s32.totalorder %s184, 0
          %s186 = scalar_select %p185, %s184, 0
          %188 = vsyncadd %s181, 0
          %s189 = sadd.s32 %s186, %s24
          %s190 = scalar_lea.hbm %s1, %s189
          %s192 = sshll.u32 %s190, 4
          %s193 = int_to_ptr.hbm [resolvable:$true] %s192
          %s194 = sshll.u32 %s183, 4
          %s195 = int_to_ptr.vmem [resolvable:$true] %s194
          %197 = dma.hbm_to_vmem [thread:$0]  %s193, 16, %s195, %s181
        $region24: #{tpu_custom_call.1} parent=15 // pred_fallthru
          _
      $region16: #{tpu_custom_call.1} parent=5 // pred_fallthru
        _
      %p198 = scmp.le.s32.totalorder 1, %s17
      %p199 = scmp.lt.s32.totalorder %s17, 3
      %p200 = pnand %p198, %p199
      %p201 = pneg %p200
      // Predicated region
      $region25: #{tpu_custom_call.1} parent=5 // pred_check
        _
      $region26: #{tpu_custom_call.1} parent=5 // pred_check_branch
        %203 = sbr.rel (%p200) target = $region28
      $region27: #{tpu_custom_call.1} parent=5 // pred_region
        %s204 = ssub.s32 %s17, 1
        %s205 = sand.u32 %s57, 1
        %s206 = scalar_lea.sflag [#allocation3], %s205
        %s207 = sand.u32 %s57, 1
        %s208 = smul.addr %s207, 8
        %s209 = scalar_lea.vmem [#allocation2], %s208
        // Predicated region
        $region29: #{tpu_custom_call.1} parent=27 // pred_check
          %p210 = pneg %p70
        $region30: #{tpu_custom_call.1} parent=27 // pred_check_branch
          %212 = sbr.rel (%p210) target = $region32
        $region31: #{tpu_custom_call.1} parent=27 // pred_region
          %214 = dma.done %s206, 128
        $region32: #{tpu_custom_call.1} parent=27 // pred_fallthru
          _
        %s215 = sand.u32 %s91, 1
        %s216 = scalar_lea.sflag [#allocation6], %s215
        %s217 = sand.u32 %s91, 1
        %s218 = scalar_lea.vmem [#allocation5], %s217
        // Predicated region
        $region33: #{tpu_custom_call.1} parent=27 // pred_check
          %p219 = pneg %p104
        $region34: #{tpu_custom_call.1} parent=27 // pred_check_branch
          %221 = sbr.rel (%p219) target = $region36
        $region35: #{tpu_custom_call.1} parent=27 // pred_region
          %223 = dma.done %s216, 16
        $region36: #{tpu_custom_call.1} parent=27 // pred_fallthru
          _
        %s224 = sand.u32 %s57, 1
        %s225 = scalar_lea.sflag [#allocation3], %s224
        %s226 = sand.u32 %s57, 1
        %s227 = smul.addr %s226, 8
        %s228 = scalar_lea.vmem [#allocation2], %s227
        %p229 = pneg %p70
        %p230 = pneg %p67
        %s231 = sand.u32 %s91, 1
        %s232 = scalar_lea.sflag [#allocation6], %s231
        %s233 = sand.u32 %s91, 1
        %s234 = scalar_lea.vmem [#allocation5], %s233
        %p235 = pneg %p104
        %p236 = pneg %p101
        %p237 = pneg %p132
        %p238 = pneg %p129
        %s239 = sand.u32 %s119, 1
        %s240 = scalar_lea.sflag [#allocation4], %s239
        %s241 = sand.u32 %s119, 1
        %s242 = scalar_lea.vmem [#allocation7], %s241
        %s243 = sadd.s32 %s28, %s29
        %p244 = scmp.lt.s32.totalorder %s243, 0
        %s245 = scalar_select %p244, %s243, 0
        %s246 = sadd.s32 %s28, %s29
        %p247 = scmp.lt.s32.totalorder %s246, 0
        %s248 = scalar_select %p247, %s246, 0
        %p249 = scmp.eq.s32.totalorder %s29, 0
        // Predicated region
        $region37: #{tpu_custom_call.1} parent=27 // pred_check
          %p250 = pneg %p249
        $region38: #{tpu_custom_call.1} parent=27 // pred_check_branch
          %252 = sbr.rel (%p250) target = $region40
        $region39: #{tpu_custom_call.1} parent=27 // pred_region
          %253 = vst [vmem:[%s242] sm:$0x1] 0.0
        $region40: #{tpu_custom_call.1} parent=27 // pred_fallthru
          _
        %v254 = vld [vmem:[%s209] sm:$0x3]
        %v255 = vld [vmem:[%s209 + $0x2] sm:$0x3]
        %v256 = vld [vmem:[%s209 + $0x4] sm:$0x3]
        %v257 = vld [vmem:[%s209 + $0x6] sm:$0x3]
        %v258 = vld [vmem:[%s218] sm:$0x1]
        %v259 = vunpack.c.0.s8 %v258
        %vm260 = vcmask 1041408
        %v261 = vsel %vm260, %v254, -inf
        %v262 = vsel %vm260, %v255, -inf
        %v263 = vsel %vm260, %v256, -inf
        %v264 = vsel %vm260, %v257, -inf
        %v265 = vmax.f32 %v261, %v262
        %v266 = vmax.f32 %v263, %v264
        %v267 = vmax.f32 %v265, %v266
        %v268 = vsub.f32 %v254, %v267
        %v269 = vsub.f32 %v255, %v267
        %v270 = vsub.f32 %v256, %v267
        %v271 = vsub.f32 %v257, %v267
        %v272 = vmul.f32 %v268, 1.442695
        %v273 = vpow.pop %v272
        %v274 = vmul.f32 %v269, 1.442695
        %v275 = vpow.pop %v274
        %v276 = vmul.f32 %v270, 1.442695
        %v277 = vpow.pop %v276
        %v278 = vmul.f32 %v271, 1.442695
        %v279 = vpow.pop %v278
        %v280 = vsel %vm260, %v273, 0.0
        %v281 = vsel %vm260, %v275, 0.0
        %v282 = vadd.f32 %v280, %v281
        %v283 = vsel %vm260, %v277, 0.0
        %v284 = vadd.f32 %v282, %v283
        %v285 = vsel %vm260, %v279, 0.0
        %v286 = vadd.f32 %v284, %v285
        %vm287 = vcmp.eq.s32.totalorder %v259, 0
        %vm288 = vcmp.eq.s32.totalorder %v259, 1
        %vm289 = vcmp.eq.s32.totalorder %v259, 2
        %vm290 = vcmp.eq.s32.totalorder %v259, 3
        %v291 = vsel %vm287, %v273, 0.0
        %v292 = vsel %vm288, %v275, 0.0
        %v293 = vsel %vm289, %v277, 0.0
        %v294 = vsel %vm290, %v279, 0.0
        %v295 = vsel %vm260, %v291, 0.0
        %v296 = vsel %vm260, %v292, 0.0
        %v297 = vadd.f32 %v295, %v296
        %v298 = vsel %vm260, %v293, 0.0
        %v299 = vadd.f32 %v297, %v298
        %v300 = vsel %vm260, %v294, 0.0
        %v301 = vadd.f32 %v299, %v300
        %v302 = vrcp.pop %v286
        %v303 = vmul.f32 %v286, %v302
        %v304 = vsub.f32 1.0, %v303
        %v305 = vmul.f32 %v302, %v304
        %v306 = vadd.f32 %v302, %v305
        %vm307 = vweird.f32 %v286
        %vm308 = vweird.f32 %v302
        %vm309 = vmor %vm307, %vm308
        %v310 = vsel %vm309, %v302, %v306
        %v311 = vand.u32 2147483647, %v286
        %vm312 = vcmp.eq.f32.partialorder %v311, 8.507059e+37
        %v313 = vand.u32 %v286, 2147483648
        %v314 = vor.u32 1.1754944e-38, %v313
        %v315 = vsel %vm312, %v314, %v310
        %v316 = vmul.f32 %v301, %v315
        %s317 = sadd.s32 %s28, %s29
        %s318 = smul.u32 %s317, 2
        %v319 = vlaneseq
        %v320 = vshrl.u32 %v319, 7
        %v321 = vstv %s318
        %v322 = vadd.s32 %v321, %v320
        %vm323 = vcmp.lt.s32.totalorder %v322, 2
        %v324 = vsel %vm323, %v316, 0.0
        %v325 = vld [vmem:[%s242] sm:$0x1]
        %v326 = vsel %vm260, %v324, 0.0
        %v327 = vrot.slane %v326, 4
        %v328 = vadd.f32 %v326, %v327
        %v329 = vrot.slane %v328, 2
        %v330 = vadd.f32 %v328, %v329
        %v331 = vrot.slane %v330, 1
        %v332 = vadd.f32 %v330, %v331
        %v333 = vadd.f32 %v325, %v332
        %334 = vst [vmem:[%s242] sm:$0x1] %v333
        %s335 = sand.u32 %s119, 1
        %s336 = scalar_lea.sflag [#allocation4], %s335
        %s337 = sand.u32 %s119, 1
        %s338 = scalar_lea.vmem [#allocation7], %s337
        // Predicated region
        $region41: #{tpu_custom_call.1} parent=27 // pred_check
          %p339 = pneg %p129
        $region42: #{tpu_custom_call.1} parent=27 // pred_check_branch
          %341 = sbr.rel (%p339) target = $region44
        $region43: #{tpu_custom_call.1} parent=27 // pred_region
          %343 = vsyncadd %s336, 0
          %s344 = sadd.s32 %s28, %s27
          %s345 = scalar_lea.hbm %s2, %s344
          %s347 = sshll.u32 %s338, 4
          %s348 = int_to_ptr.vmem [resolvable:$true] %s347
          %s349 = sshll.u32 %s345, 4
          %s350 = int_to_ptr.hbm [resolvable:$true] %s349
          %352 = dma.vmem_to_hbm [thread:$0]  %s348, 16, %s350, %s336
        $region44: #{tpu_custom_call.1} parent=27 // pred_fallthru
          _
      $region28: #{tpu_custom_call.1} parent=5 // pred_fallthru
        _
      %p353 = scmp.le.s32.totalorder 2, %s17
      // Predicated region
      $region45: #{tpu_custom_call.1} parent=5 // pred_check
        %p354 = pneg %p353
      $region46: #{tpu_custom_call.1} parent=5 // pred_check_branch
        %356 = sbr.rel (%p354) target = $region48
      $region47: #{tpu_custom_call.1} parent=5 // pred_region
        %s357 = ssub.s32 %s17, 2
        // Predicated region
        $region49: #{tpu_custom_call.1} parent=47 // pred_check
          %p358 = pneg %p135
        $region50: #{tpu_custom_call.1} parent=47 // pred_check_branch
          %360 = sbr.rel (%p358) target = $region52
        $region51: #{tpu_custom_call.1} parent=47 // pred_region
          %s361 = sand.u32 %s120, 1
          %s362 = scalar_lea.sflag [#allocation4], %s361
          %s363 = sand.u32 %s120, 1
          %s364 = scalar_lea.vmem [#allocation7], %s363
          %366 = dma.done %s362, 16
        $region52: #{tpu_custom_call.1} parent=47 // pred_fallthru
          _
      $region48: #{tpu_custom_call.1} parent=5 // pred_fallthru
        _
    $region6: #{tpu_custom_call.1} parent=1 // loop_footer
      %s21 = sadd.s32 1, %s17
    $region7: #{tpu_custom_call.1} parent=1 // loop_footer_branch
      %16 = sbr.rel target = $region3
    $region8: #{tpu_custom_call.1} parent=1 // loop_exit
      _
    %367 = vsyncpa [#allocation3], 1
    %s368 = scalar_lea.sflag [#allocation3], 1
    %369 = vsyncpa %s368, 1
    %370 = vsyncpa [#allocation6], 1
    %s371 = scalar_lea.sflag [#allocation6], 1
    %372 = vsyncpa %s371, 1
    %373 = vsyncpa [#allocation4], 1
    %s374 = scalar_lea.sflag [#allocation4], 1
    %375 = vsyncpa %s374, 1

</llo_original>
